<compile_context>
chip_gen: v5e
topology: v5e:2x2
jax: 0.10.0
libtpu: 0.0.40
codegen_flags: <defaults>
</compile_context>

<pallas_src>
import functools

import jax
import jax.numpy as jnp
from jax.experimental import pallas as pl
from jax.experimental.pallas import tpu as pltpu


def _silu(x):
    return x * jax.nn.sigmoid(x)


def dilated_resnet_block_kernel(
    xstk_ref, w1_ref, w2_ref, b1_ref, b2_ref, *rest,
    kernel_size, dilation, seq_len, c_in, c_out, use_downsample, compute_dtype):
    if use_downsample:
        wd_ref, o_ref, h1stk_ref = rest
    else:
        o_ref, h1stk_ref = rest

    K, d, L = kernel_size, dilation, seq_len
    P = d * (K - 1)

    # (K*C_in, L) im2col slab of the causally padded input (built in wrapper).
    x_stk = xstk_ref[0]

    # ---- block1: fused dilated conv (single MXU matmul) + BN shift + SiLU ---
    h1 = jnp.dot(w1_ref[...], x_stk.astype(compute_dtype),
                 preferred_element_type=jnp.float32)
    h1 = h1 + b1_ref[...]
    # TODO(synk): Dropout is identity here (eval-mode / deterministic semantics).
    h1 = _silu(h1)

    # ---- block2: causal shifts of h1 written into persistent VMEM scratch ---
    # h1stk[k*C_out + c, l] = 0 if (k*d + l) < P else h1[c, k*d + l - P]
    for k in range(K):
        z = P - k * d                        # leading zeros for this tap
        rows = slice(k * c_out, (k + 1) * c_out)
        if z > 0:
            h1stk_ref[rows, :z] = jnp.zeros((c_out, z), jnp.float32)
            h1stk_ref[rows, z:] = h1[:, :L - z]
        else:
            h1stk_ref[rows, :] = h1
    h2 = jnp.dot(w2_ref[...], h1stk_ref[...].astype(compute_dtype),
                 preferred_element_type=jnp.float32)
    h2 = h2 + b2_ref[...]

    # ---- residual: last tap block of the slab is the un-shifted input x -----
    x_res = x_stk[(K - 1) * c_in:, :]
    if use_downsample:
        res = jnp.dot(wd_ref[...], x_res.astype(compute_dtype),
                      preferred_element_type=jnp.float32)
    else:
        res = x_res.astype(jnp.float32)

    y = h2 + res
    o_ref[0] = _silu(y).astype(o_ref.dtype)


def dilated_resnet_block(x, params, *, kernel_size=3, dilation=1, eps=1e-5,
                         compute_dtype=jnp.bfloat16):
    """x: (N, C_in, L) float32. Returns (N, C_out, L) in x.dtype."""
    w1, w2 = params["w1"], params["w2"]
    N, C_in, L = x.shape
    C_out = w1.shape[0]
    K, d = kernel_size, dilation
    P = d * (K - 1)
    assert L > P, "sequence length must exceed the causal pad"

    # ---- XLA-side glue ------------------------------------------------------
    # BatchNorm (eval): scale folded into conv weights, shift kept as bias.
    s1 = params["gamma1"] / jnp.sqrt(params["var1"] + eps)
    b1 = (params["beta1"] - params["mean1"] * s1).reshape(C_out, 1)
    s2 = params["gamma2"] / jnp.sqrt(params["var2"] + eps)
    b2 = (params["beta2"] - params["mean2"] * s2).reshape(C_out, 1)

    # Weight layout: fold BN scale, move tap axis off the lane dim -> (C_out, K*C_in).
    w1r = (w1 * s1[:, None, None]).transpose(0, 2, 1).reshape(C_out, K * C_in)
    w2r = (w2 * s2[:, None, None]).transpose(0, 2, 1).reshape(C_out, K * C_out)
    w1r = w1r.astype(compute_dtype)
    w2r = w2r.astype(compute_dtype)

    # Causal left pad + im2col along channels: xstk[:, k*C_in + c, l] = xpad[:, c, k*d + l].
    xp = jnp.pad(x, ((0, 0), (0, 0), (P, 0)))
    xstk = jnp.concatenate([xp[:, :, k * d:k * d + L] for k in range(K)], axis=1)

    use_downsample = (C_in != C_out)

    def full(a):
        nd = a.ndim
        return pl.BlockSpec(a.shape, lambda n: (0,) * nd)

    args = [xstk, w1r, w2r, b1, b2]
    in_specs = [
        pl.BlockSpec((1, K * C_in, L), lambda n: (n, 0, 0)),
        full(w1r), full(w2r), full(b1), full(b2),
    ]
    if use_downsample:
        wdc = params["wd"].astype(compute_dtype)
        args.append(wdc)
        in_specs.append(full(wdc))

    kernel = functools.partial(
        dilated_resnet_block_kernel,
        kernel_size=K, dilation=d, seq_len=L,
        c_in=C_in, c_out=C_out,
        use_downsample=use_downsample, compute_dtype=compute_dtype)

    grid_spec = pltpu.PrefetchScalarGridSpec(
        num_scalar_prefetch=0,
        grid=(N,),
        in_specs=in_specs,
        out_specs=pl.BlockSpec((1, C_out, L), lambda n: (n, 0, 0)),
        scratch_shapes=[pltpu.VMEM((K * C_out, L), jnp.float32)],
    )
    return pl.pallas_call(
        kernel,
        out_shape=jax.ShapeDtypeStruct((N, C_out, L), x.dtype),
        grid_spec=grid_spec,
        compiler_params=pltpu.CompilerParams(dimension_semantics=("parallel",)),
    )(*args)


def reference(x, params, kernel_size, dilation, eps=1e-5):
    """Pure-JAX f32 reference mirroring the PyTorch forward (eval mode)."""
    K, d = kernel_size, dilation
    P = d * (K - 1)

    def causal_conv(inp, w):
        ip = jnp.pad(inp, ((0, 0), (0, 0), (P, 0)))
        L = inp.shape[-1]
        return sum(jnp.einsum("oi,nil->nol", w[:, :, k], ip[:, :, k * d:k * d + L])
                   for k in range(K))

    s1 = params["gamma1"] / jnp.sqrt(params["var1"] + eps)
    b1 = params["beta1"] - params["mean1"] * s1
    s2 = params["gamma2"] / jnp.sqrt(params["var2"] + eps)
    b2 = params["beta2"] - params["mean2"] * s2

    h1 = causal_conv(x, params["w1"]) * s1[None, :, None] + b1[None, :, None]
    h1 = h1 * jax.nn.sigmoid(h1)
    h2 = causal_conv(h1, params["w2"]) * s2[None, :, None] + b2[None, :, None]
    if params["w1"].shape[0] != params["w1"].shape[1]:
        res = jnp.einsum("oi,nil->nol", params["wd"], x)
    else:
        res = x
    y = h2 + res
    return y * jax.nn.sigmoid(y)


if __name__ == "__main__":
    N, C_in, C_out, L = 2, 4, 8, 128
    K, DIL = 3, 2

    key = jax.random.PRNGKey(0)
    ks = jax.random.split(key, 12)
    x = jax.random.normal(ks[0], (N, C_in, L), jnp.float32)
    params = dict(
        w1=0.3 * jax.random.normal(ks[1], (C_out, C_in, K), jnp.float32),
        w2=0.3 * jax.random.normal(ks[2], (C_out, C_out, K), jnp.float32),
        wd=0.3 * jax.random.normal(ks[3], (C_out, C_in), jnp.float32),
        gamma1=1.0 + 0.1 * jax.random.normal(ks[4], (C_out,), jnp.float32),
        beta1=0.1 * jax.random.normal(ks[5], (C_out,), jnp.float32),
        mean1=0.1 * jax.random.normal(ks[6], (C_out,), jnp.float32),
        var1=1.0 + 0.5 * jax.random.uniform(ks[7], (C_out,), jnp.float32),
        gamma2=1.0 + 0.1 * jax.random.normal(ks[8], (C_out,), jnp.float32),
        beta2=0.1 * jax.random.normal(ks[9], (C_out,), jnp.float32),
        mean2=0.1 * jax.random.normal(ks[10], (C_out,), jnp.float32),
        var2=1.0 + 0.5 * jax.random.uniform(ks[11], (C_out,), jnp.float32),
    )

    ref = reference(x, params, K, DIL)

    # Fast path: bf16 matmul operands, f32 accumulation / element-wise math.
    out = dilated_resnet_block(x, params, kernel_size=K, dilation=DIL,
                               compute_dtype=jnp.bfloat16)
    out = jax.block_until_ready(out)
    assert out.shape == (N, C_out, L), out.shape
    assert jnp.max(jnp.abs(out - ref)) < 5e-2, float(jnp.max(jnp.abs(out - ref)))

    # Full-f32 path for a tight numerical check of the kernel structure.
    out32 = dilated_resnet_block(x, params, kernel_size=K, dilation=DIL,
                                 compute_dtype=jnp.float32)
    out32 = jax.block_until_ready(out32)
    assert jnp.max(jnp.abs(out32 - ref)) < 1e-4, float(jnp.max(jnp.abs(out32 - ref)))

    print("KERNEL_OK")
</pallas_src>

<mosaic_0001>
module attributes {stable_mosaic.version = 11 : i64} {
  func.func @dilated_resnet_block_kernel(%arg0: i32, %arg1: memref<1x12x128xf32, #tpu.memory_space<vmem>>, %arg2: memref<8x12xbf16, #tpu.memory_space<vmem>>, %arg3: memref<8x24xbf16, #tpu.memory_space<vmem>>, %arg4: memref<8x1xf32, #tpu.memory_space<vmem>>, %arg5: memref<8x1xf32, #tpu.memory_space<vmem>>, %arg6: memref<8x4xbf16, #tpu.memory_space<vmem>>, %arg7: memref<1x8x128xf32, #tpu.memory_space<vmem>>, %arg8: memref<24x128xf32, #tpu.memory_space<vmem>>) attributes {dimension_semantics = [#tpu.dimension_semantics<parallel>], iteration_bounds = array<i64: 2>, scalar_prefetch = 0 : i64, scratch_operands = 1 : i64, tpu.core_type = #tpu.core_type<tc>, window_params = [{transform_indices = @transform_0, window_bounds = array<i64: 1, 12, 128>}, {pipeline_mode = #tpu.pipeline_mode<synchronous>, transform_indices = @transform_1, window_bounds = array<i64: 8, 12>}, {pipeline_mode = #tpu.pipeline_mode<synchronous>, transform_indices = @transform_2, window_bounds = array<i64: 8, 24>}, {pipeline_mode = #tpu.pipeline_mode<synchronous>, transform_indices = @transform_3, window_bounds = array<i64: 8, 1>}, {pipeline_mode = #tpu.pipeline_mode<synchronous>, transform_indices = @transform_4, window_bounds = array<i64: 8, 1>}, {pipeline_mode = #tpu.pipeline_mode<synchronous>, transform_indices = @transform_5, window_bounds = array<i64: 8, 4>}, {transform_indices = @transform_6, window_bounds = array<i64: 1, 8, 128>}]} {
    %c0 = arith.constant 0 : index
    %c0_0 = arith.constant 0 : index
    %c0_1 = arith.constant 0 : index
    %0 = vector.load %arg1[%c0, %c0_0, %c0_1] : memref<1x12x128xf32, #tpu.memory_space<vmem>>, vector<1x12x128xf32>
    %1 = vector.shape_cast %0 : vector<1x12x128xf32> to vector<12x128xf32>
    %c0_2 = arith.constant 0 : index
    %c0_3 = arith.constant 0 : index
    %2 = vector.load %arg2[%c0_2, %c0_3] : memref<8x12xbf16, #tpu.memory_space<vmem>>, vector<8x12xbf16>
    %3 = arith.truncf %1 : vector<12x128xf32> to vector<12x128xbf16>
    %cst = arith.constant dense<0.000000e+00> : vector<8x128xf32>
    %4 = tpu.matmul %2, %3, %cst {dimension_numbers = #tpu.dot_dimension_numbers<[1], [0], [0], [1], [0, 0, 1, 1], [], []>} : vector<8x12xbf16>, vector<12x128xbf16>, vector<8x128xf32> -> vector<8x128xf32>
    %c0_4 = arith.constant 0 : index
    %c0_5 = arith.constant 0 : index
    %5 = vector.load %arg4[%c0_4, %c0_5] : memref<8x1xf32, #tpu.memory_space<vmem>>, vector<8x1xf32>
    %6 = vector.broadcast %5 : vector<8x1xf32> to vector<8x128xf32>
    %7 = arith.addf %4, %6 : vector<8x128xf32>
    %8 = arith.negf %7 : vector<8x128xf32>
    %9 = math.exp %8 : vector<8x128xf32>
    %cst_6 = arith.constant 1.000000e+00 : f32
    %10 = vector.broadcast %cst_6 : f32 to vector<8x128xf32>
    %11 = arith.addf %10, %9 : vector<8x128xf32>
    %12 = arith.divf %10, %11 : vector<8x128xf32>
    %13 = arith.mulf %7, %12 : vector<8x128xf32>
    %cst_7 = arith.constant 0.000000e+00 : f32
    %14 = vector.broadcast %cst_7 : f32 to vector<8x4xf32>
    %c0_8 = arith.constant 0 : index
    %c0_9 = arith.constant 0 : index
    %15 = vector.load %arg8[%c0_8, %c0_9] : memref<24x128xf32, #tpu.memory_space<vmem>>, vector<8x4xf32>
    tpu.vector_store %arg8[%c0_8, %c0_9], %14 {strides = array<i32>} : memref<24x128xf32, #tpu.memory_space<vmem>>, vector<8x4xf32>,
    %16 = vector.extract_strided_slice %13 {offsets = [0, 0], sizes = [8, 124], strides = [1, 1]} : vector<8x128xf32> to vector<8x124xf32>
    %c0_10 = arith.constant 0 : index
    %c4 = arith.constant 4 : index
    %17 = vector.load %arg8[%c0_10, %c4] : memref<24x128xf32, #tpu.memory_space<vmem>>, vector<8x124xf32>
    tpu.vector_store %arg8[%c0_10, %c4], %16 {strides = array<i32>} : memref<24x128xf32, #tpu.memory_space<vmem>>, vector<8x124xf32>,
    %cst_11 = arith.constant 0.000000e+00 : f32
    %18 = vector.broadcast %cst_11 : f32 to vector<8x2xf32>
    %c8 = arith.constant 8 : index
    %c0_12 = arith.constant 0 : index
    %19 = vector.load %arg8[%c8, %c0_12] : memref<24x128xf32, #tpu.memory_space<vmem>>, vector<8x2xf32>
    tpu.vector_store %arg8[%c8, %c0_12], %18 {strides = array<i32>} : memref<24x128xf32, #tpu.memory_space<vmem>>, vector<8x2xf32>,
    %20 = vector.extract_strided_slice %13 {offsets = [0, 0], sizes = [8, 126], strides = [1, 1]} : vector<8x128xf32> to vector<8x126xf32>
    %c8_13 = arith.constant 8 : index
    %c2 = arith.constant 2 : index
    %21 = vector.load %arg8[%c8_13, %c2] : memref<24x128xf32, #tpu.memory_space<vmem>>, vector<8x126xf32>
    tpu.vector_store %arg8[%c8_13, %c2], %20 {strides = array<i32>} : memref<24x128xf32, #tpu.memory_space<vmem>>, vector<8x126xf32>,
    %c16 = arith.constant 16 : index
    %c0_14 = arith.constant 0 : index
    %22 = vector.load %arg8[%c16, %c0_14] : memref<24x128xf32, #tpu.memory_space<vmem>>, vector<8x128xf32>
    tpu.vector_store %arg8[%c16, %c0_14], %13 {strides = array<i32>} : memref<24x128xf32, #tpu.memory_space<vmem>>, vector<8x128xf32>,
    %c0_15 = arith.constant 0 : index
    %c0_16 = arith.constant 0 : index
    %23 = vector.load %arg3[%c0_15, %c0_16] : memref<8x24xbf16, #tpu.memory_space<vmem>>, vector<8x24xbf16>
    %c0_17 = arith.constant 0 : index
    %c0_18 = arith.constant 0 : index
    %24 = vector.load %arg8[%c0_17, %c0_18] : memref<24x128xf32, #tpu.memory_space<vmem>>, vector<24x128xf32>
    %25 = arith.truncf %24 : vector<24x128xf32> to vector<24x128xbf16>
    %cst_19 = arith.constant dense<0.000000e+00> : vector<8x128xf32>
    %26 = tpu.matmul %23, %25, %cst_19 {dimension_numbers = #tpu.dot_dimension_numbers<[1], [0], [0], [1], [0, 0, 1, 1], [], []>} : vector<8x24xbf16>, vector<24x128xbf16>, vector<8x128xf32> -> vector<8x128xf32>
    %c0_20 = arith.constant 0 : index
    %c0_21 = arith.constant 0 : index
    %27 = vector.load %arg5[%c0_20, %c0_21] : memref<8x1xf32, #tpu.memory_space<vmem>>, vector<8x1xf32>
    %28 = vector.broadcast %27 : vector<8x1xf32> to vector<8x128xf32>
    %29 = arith.addf %26, %28 : vector<8x128xf32>
    %30 = vector.extract_strided_slice %1 {offsets = [8, 0], sizes = [4, 128], strides = [1, 1]} : vector<12x128xf32> to vector<4x128xf32>
    %c0_22 = arith.constant 0 : index
    %c0_23 = arith.constant 0 : index
    %31 = vector.load %arg6[%c0_22, %c0_23] : memref<8x4xbf16, #tpu.memory_space<vmem>>, vector<8x4xbf16>
    %32 = arith.truncf %30 : vector<4x128xf32> to vector<4x128xbf16>
    %cst_24 = arith.constant dense<0.000000e+00> : vector<8x128xf32>
    %33 = tpu.matmul %31, %32, %cst_24 {dimension_numbers = #tpu.dot_dimension_numbers<[1], [0], [0], [1], [0, 0, 1, 1], [], []>} : vector<8x4xbf16>, vector<4x128xbf16>, vector<8x128xf32> -> vector<8x128xf32>
    %34 = arith.addf %29, %33 : vector<8x128xf32>
    %35 = arith.negf %34 : vector<8x128xf32>
    %36 = math.exp %35 : vector<8x128xf32>
    %cst_25 = arith.constant 1.000000e+00 : f32
    %37 = vector.broadcast %cst_25 : f32 to vector<8x128xf32>
    %38 = arith.addf %37, %36 : vector<8x128xf32>
    %39 = arith.divf %37, %38 : vector<8x128xf32>
    %40 = arith.mulf %34, %39 : vector<8x128xf32>
    %c0_26 = arith.constant 0 : index
    %c0_27 = arith.constant 0 : index
    %c0_28 = arith.constant 0 : index
    %41 = vector.load %arg7[%c0_26, %c0_27, %c0_28] : memref<1x8x128xf32, #tpu.memory_space<vmem>>, vector<1x8x128xf32>
    %42 = vector.shape_cast %41 : vector<1x8x128xf32> to vector<8x128xf32>
    %43 = vector.shape_cast %40 : vector<8x128xf32> to vector<1x8x128xf32>
    tpu.vector_store %arg7[%c0_26, %c0_27, %c0_28], %43 {strides = array<i32>} : memref<1x8x128xf32, #tpu.memory_space<vmem>>, vector<1x8x128xf32>,
    return
  }
  func.func @transform_0(%arg0: i32) -> (i32, i32, i32) {
    %c0_i32 = arith.constant 0 : i32
    %c0_i32_0 = arith.constant 0 : i32
    %c0_i32_1 = arith.constant 0 : i32
    return %arg0, %c0_i32, %c0_i32_0 : i32, i32, i32
  }
  func.func @transform_1(%arg0: i32) -> (i32, i32) {
    %c0_i32 = arith.constant 0 : i32
    %c0_i32_0 = arith.constant 0 : i32
    %c0_i32_1 = arith.constant 0 : i32
    return %c0_i32, %c0_i32_0 : i32, i32
  }
  func.func @transform_2(%arg0: i32) -> (i32, i32) {
    %c0_i32 = arith.constant 0 : i32
    %c0_i32_0 = arith.constant 0 : i32
    %c0_i32_1 = arith.constant 0 : i32
    return %c0_i32, %c0_i32_0 : i32, i32
  }
  func.func @transform_3(%arg0: i32) -> (i32, i32) {
    %c0_i32 = arith.constant 0 : i32
    %c0_i32_0 = arith.constant 0 : i32
    %c0_i32_1 = arith.constant 0 : i32
    return %c0_i32, %c0_i32_0 : i32, i32
  }
  func.func @transform_4(%arg0: i32) -> (i32, i32) {
    %c0_i32 = arith.constant 0 : i32
    %c0_i32_0 = arith.constant 0 : i32
    %c0_i32_1 = arith.constant 0 : i32
    return %c0_i32, %c0_i32_0 : i32, i32
  }
  func.func @transform_5(%arg0: i32) -> (i32, i32) {
    %c0_i32 = arith.constant 0 : i32
    %c0_i32_0 = arith.constant 0 : i32
    %c0_i32_1 = arith.constant 0 : i32
    return %c0_i32, %c0_i32_0 : i32, i32
  }
  func.func @transform_6(%arg0: i32) -> (i32, i32, i32) {
    %c0_i32 = arith.constant 0 : i32
    %c0_i32_0 = arith.constant 0 : i32
    %c0_i32_1 = arith.constant 0 : i32
    return %arg0, %c0_i32, %c0_i32_0 : i32, i32, i32
  }
}

</mosaic_0001>

<llo_original>
// kernel: tpu_custom_call.1
$region0: #{tpu_custom_call.1}
  #allocation0 [shape = 'u32[]', space=smem, size = 0x4, offset = 0x4, fixed_abs, tag = 'smem constant byte address 0x4 - core index']
  #allocation1 [shape = 'u32[72,128]{1,0:T(1,128)}', space=vmem, size = 0x9000, scoped, tag = 'internal scratch']
  #allocation2 [shape = 'f32[24,128]{1,0:T(8,128)}', space=vmem, size = 0x3000, scoped, tag = 'scratch operand']
  %s0 = inlined_call_operand.vmem [shape: f32[2,12,128], index: 0, kind: input, shape index: {}]
  %s1 = inlined_call_operand.vmem [shape: bf16[8,12], index: 1, kind: input, shape index: {}]
  %s2 = inlined_call_operand.vmem [shape: bf16[8,24], index: 2, kind: input, shape index: {}]
  %s3 = inlined_call_operand.vmem [shape: f32[8,1], index: 3, kind: input, shape index: {}]
  %s4 = inlined_call_operand.vmem [shape: f32[8,1], index: 4, kind: input, shape index: {}]
  %s5 = inlined_call_operand.vmem [shape: bf16[8,4], index: 5, kind: input, shape index: {}]
  %s6 = inlined_call_operand.hbm [shape: f32[2,8,128], index: 6, kind: output, shape index: {}]
  %s7 = sld [smem:[#allocation0]]
  $region57: #{tpu_custom_call.1} parent=0
    _
  %s9 = ssub.s32 1, %s7
  %s10 = scalar_select 0, %s9, %s7
  $region1: #{tpu_custom_call.1} parent=0
    #allocation3 [shape = 'u8[8192]{0}', space=vmem, size = 0x2000, scoped, tag = 'output window, operand 0']
    #allocation4 [shape = 's32[2]{0}', space=sflag, size = 0x8, scoped, tag = 'scoped memory for tpu_custom_call.1']
    %11 = vsyncpa [#allocation4], 0
    %s12 = scalar_lea.sflag [#allocation4], 1
    %13 = vsyncpa %s12, 0
    loop: start=0, step=1, limit=4
    $region2: #{tpu_custom_call.1} parent=1 // loop_pre_header
      _
    $region3: #{tpu_custom_call.1} parent=1 // loop_header
      %s15 = sphi 0, %s19
      %p16 = scmp.ge.s32.totalorder %s15, 4
      %s25 = sphi 0, %s27
      %s28 = sphi 0, %s25
      %s29 = sphi 0, %s28
      %s45 = sphi 0, %s29
      %s49 = sphi 0, %s49
      %s51 = sphi 0, %s49
      %s52 = sphi 0, %s51
      %s66 = sphi 0, %s52
      %s70 = sphi 0, %s70
      %s72 = sphi 0, %s70
      %s73 = sphi 0, %s72
      %s87 = sphi 0, %s73
      %s91 = sphi 0, %s91
      %s93 = sphi 0, %s91
      %s94 = sphi 0, %s93
      %s108 = sphi 0, %s94
      %s112 = sphi 0, %s112
      %s114 = sphi 0, %s112
      %s115 = sphi 0, %s114
      %s129 = sphi 0, %s115
      %s133 = sphi 0, %s133
      %s135 = sphi 0, %s133
      %s136 = sphi 0, %s135
      %s150 = sphi 0, %s136
      %s156 = sphi 0, %s158
      %s159 = sphi 0, %s156
      %s160 = sphi 0, %s159
      %s176 = sphi 0, %s160
    $region4: #{tpu_custom_call.1} parent=1 // loop_header_branch
      %18 = sbr.rel (%p16) target = $region8
    $region5: #{tpu_custom_call.1} parent=1 // loop_body
      %s20 = ssub.s32 %s15, 1
      %s21 = ssub.s32 %s15, 2
      %s22 = sadd.s32 %s15, 1
      %s23 = ssub.s32 %s15, %s22
      %p24 = scmp.eq.s32.totalorder %s23, 0
      %s26 = sadd.s32 %s25, 1
      %s27 = scalar_select %p24, %s25, %s26
      %p30 = pneg %p24
      %p31 = scmp.eq.s32.totalorder %s15, 1
      %p32 = por %p30, %p31
      %p33 = scmp.ne.s32.totalorder %s25, %s28
      %p34 = scmp.eq.s32.totalorder %s15, 0
      %p35 = por %p33, %p34
      %p36 = scmp.ne.s32.totalorder %s25, %s28
      %p37 = scmp.eq.s32.totalorder %s20, 1
      %p38 = por %p36, %p37
      %p39 = scmp.ne.s32.totalorder %s28, %s29
      %p40 = scmp.eq.s32.totalorder %s20, 0
      %p41 = por %p39, %p40
      %p42 = scmp.ne.s32.totalorder %s28, %s29
      %p43 = scmp.eq.s32.totalorder %s21, 1
      %p44 = por %p42, %p43
      %p46 = scmp.ne.s32.totalorder %s29, %s45
      %p47 = scmp.eq.s32.totalorder %s21, 0
      %p48 = por %p46, %p47
      %s50 = sadd.s32 %s49, 1
      %p53 = scmp.eq.s32.totalorder %s15, 1
      %p54 = scmp.ne.s32.totalorder %s49, %s51
      %p55 = scmp.eq.s32.totalorder %s15, 0
      %p56 = por %p54, %p55
      %p57 = scmp.ne.s32.totalorder %s49, %s51
      %p58 = scmp.eq.s32.totalorder %s20, 1
      %p59 = por %p57, %p58
      %p60 = scmp.ne.s32.totalorder %s51, %s52
      %p61 = scmp.eq.s32.totalorder %s20, 0
      %p62 = por %p60, %p61
      %p63 = scmp.ne.s32.totalorder %s51, %s52
      %p64 = scmp.eq.s32.totalorder %s21, 1
      %p65 = por %p63, %p64
      %p67 = scmp.ne.s32.totalorder %s52, %s66
      %p68 = scmp.eq.s32.totalorder %s21, 0
      %p69 = por %p67, %p68
      %s71 = sadd.s32 %s70, 1
      %p74 = scmp.eq.s32.totalorder %s15, 1
      %p75 = scmp.ne.s32.totalorder %s70, %s72
      %p76 = scmp.eq.s32.totalorder %s15, 0
      %p77 = por %p75, %p76
      %p78 = scmp.ne.s32.totalorder %s70, %s72
      %p79 = scmp.eq.s32.totalorder %s20, 1
      %p80 = por %p78, %p79
      %p81 = scmp.ne.s32.totalorder %s72, %s73
      %p82 = scmp.eq.s32.totalorder %s20, 0
      %p83 = por %p81, %p82
      %p84 = scmp.ne.s32.totalorder %s72, %s73
      %p85 = scmp.eq.s32.totalorder %s21, 1
      %p86 = por %p84, %p85
      %p88 = scmp.ne.s32.totalorder %s73, %s87
      %p89 = scmp.eq.s32.totalorder %s21, 0
      %p90 = por %p88, %p89
      %s92 = sadd.s32 %s91, 1
      %p95 = scmp.eq.s32.totalorder %s15, 1
      %p96 = scmp.ne.s32.totalorder %s91, %s93
      %p97 = scmp.eq.s32.totalorder %s15, 0
      %p98 = por %p96, %p97
      %p99 = scmp.ne.s32.totalorder %s91, %s93
      %p100 = scmp.eq.s32.totalorder %s20, 1
      %p101 = por %p99, %p100
      %p102 = scmp.ne.s32.totalorder %s93, %s94
      %p103 = scmp.eq.s32.totalorder %s20, 0
      %p104 = por %p102, %p103
      %p105 = scmp.ne.s32.totalorder %s93, %s94
      %p106 = scmp.eq.s32.totalorder %s21, 1
      %p107 = por %p105, %p106
      %p109 = scmp.ne.s32.totalorder %s94, %s108
      %p110 = scmp.eq.s32.totalorder %s21, 0
      %p111 = por %p109, %p110
      %s113 = sadd.s32 %s112, 1
      %p116 = scmp.eq.s32.totalorder %s15, 1
      %p117 = scmp.ne.s32.totalorder %s112, %s114
      %p118 = scmp.eq.s32.totalorder %s15, 0
      %p119 = por %p117, %p118
      %p120 = scmp.ne.s32.totalorder %s112, %s114
      %p121 = scmp.eq.s32.totalorder %s20, 1
      %p122 = por %p120, %p121
      %p123 = scmp.ne.s32.totalorder %s114, %s115
      %p124 = scmp.eq.s32.totalorder %s20, 0
      %p125 = por %p123, %p124
      %p126 = scmp.ne.s32.totalorder %s114, %s115
      %p127 = scmp.eq.s32.totalorder %s21, 1
      %p128 = por %p126, %p127
      %p130 = scmp.ne.s32.totalorder %s115, %s129
      %p131 = scmp.eq.s32.totalorder %s21, 0
      %p132 = por %p130, %p131
      %s134 = sadd.s32 %s133, 1
      %p137 = scmp.eq.s32.totalorder %s15, 1
      %p138 = scmp.ne.s32.totalorder %s133, %s135
      %p139 = scmp.eq.s32.totalorder %s15, 0
      %p140 = por %p138, %p139
      %p141 = scmp.ne.s32.totalorder %s133, %s135
      %p142 = scmp.eq.s32.totalorder %s20, 1
      %p143 = por %p141, %p142
      %p144 = scmp.ne.s32.totalorder %s135, %s136
      %p145 = scmp.eq.s32.totalorder %s20, 0
      %p146 = por %p144, %p145
      %p147 = scmp.ne.s32.totalorder %s135, %s136
      %p148 = scmp.eq.s32.totalorder %s21, 1
      %p149 = por %p147, %p148
      %p151 = scmp.ne.s32.totalorder %s136, %s150
      %p152 = scmp.eq.s32.totalorder %s21, 0
      %p153 = por %p151, %p152
      %s154 = ssub.s32 %s15, %s22
      %p155 = scmp.eq.s32.totalorder %s154, 0
      %s157 = sadd.s32 %s156, 1
      %s158 = scalar_select %p155, %s156, %s157
      %p161 = pneg %p155
      %p162 = scmp.eq.s32.totalorder %s15, 1
      %p163 = por %p161, %p162
      %p164 = scmp.ne.s32.totalorder %s156, %s159
      %p165 = scmp.eq.s32.totalorder %s15, 0
      %p166 = por %p164, %p165
      %p167 = scmp.ne.s32.totalorder %s156, %s159
      %p168 = scmp.eq.s32.totalorder %s20, 1
      %p169 = por %p167, %p168
      %p170 = scmp.ne.s32.totalorder %s159, %s160
      %p171 = scmp.eq.s32.totalorder %s20, 0
      %p172 = por %p170, %p171
      %p173 = scmp.ne.s32.totalorder %s159, %s160
      %p174 = scmp.eq.s32.totalorder %s21, 1
      %p175 = por %p173, %p174
      %p177 = scmp.ne.s32.totalorder %s160, %s176
      %p178 = scmp.eq.s32.totalorder %s21, 0
      %p179 = por %p177, %p178
      %p180 = scmp.le.s32.totalorder 1, %s15
      %p181 = scmp.lt.s32.totalorder %s15, 3
      %p182 = pnand %p180, %p181
      %p183 = pneg %p182
      // Predicated region
      $region9: #{tpu_custom_call.1} parent=5 // pred_check
        _
      $region10: #{tpu_custom_call.1} parent=5 // pred_check_branch
        %185 = sbr.rel (%p182) target = $region12
      $region11: #{tpu_custom_call.1} parent=5 // pred_region
        %s186 = ssub.s32 %s15, 1
        // Predicated region
        $region13: #{tpu_custom_call.1} parent=11 // pred_check
          %p187 = pneg %p62
        $region14: #{tpu_custom_call.1} parent=11 // pred_check_branch
          %189 = sbr.rel (%p187) target = $region16
        $region15: #{tpu_custom_call.1} parent=11 // pred_region
          _
        $region16: #{tpu_custom_call.1} parent=11 // pred_fallthru
          _
        // Predicated region
        $region17: #{tpu_custom_call.1} parent=11 // pred_check
          %p190 = pneg %p83
        $region18: #{tpu_custom_call.1} parent=11 // pred_check_branch
          %192 = sbr.rel (%p190) target = $region20
        $region19: #{tpu_custom_call.1} parent=11 // pred_region
          _
        $region20: #{tpu_custom_call.1} parent=11 // pred_fallthru
          _
        // Predicated region
        $region21: #{tpu_custom_call.1} parent=11 // pred_check
          %p193 = pneg %p104
        $region22: #{tpu_custom_call.1} parent=11 // pred_check_branch
          %195 = sbr.rel (%p193) target = $region24
        $region23: #{tpu_custom_call.1} parent=11 // pred_region
          _
        $region24: #{tpu_custom_call.1} parent=11 // pred_fallthru
          _
        // Predicated region
        $region25: #{tpu_custom_call.1} parent=11 // pred_check
          %p196 = pneg %p125
        $region26: #{tpu_custom_call.1} parent=11 // pred_check_branch
          %198 = sbr.rel (%p196) target = $region28
        $region27: #{tpu_custom_call.1} parent=11 // pred_region
          _
        $region28: #{tpu_custom_call.1} parent=11 // pred_fallthru
          _
        // Predicated region
        $region29: #{tpu_custom_call.1} parent=11 // pred_check
          %p199 = pneg %p146
        $region30: #{tpu_custom_call.1} parent=11 // pred_check_branch
          %201 = sbr.rel (%p199) target = $region32
        $region31: #{tpu_custom_call.1} parent=11 // pred_region
          _
        $region32: #{tpu_custom_call.1} parent=11 // pred_fallthru
          _
      $region12: #{tpu_custom_call.1} parent=5 // pred_fallthru
        _
      %p202 = scmp.lt.s32.totalorder %s15, 2
      // Predicated region
      $region33: #{tpu_custom_call.1} parent=5 // pred_check
        %p203 = pneg %p202
      $region34: #{tpu_custom_call.1} parent=5 // pred_check_branch
        %205 = sbr.rel (%p203) target = $region36
      $region35: #{tpu_custom_call.1} parent=5 // pred_region
        // Predicated region
        $region37: #{tpu_custom_call.1} parent=35 // pred_check
          %p206 = pneg %p35
        $region38: #{tpu_custom_call.1} parent=35 // pred_check_branch
          %208 = sbr.rel (%p206) target = $region40
        $region39: #{tpu_custom_call.1} parent=35 // pred_region
          %p209 = scmp.lt.s32.totalorder %s15, 1
          %s210 = scalar_select %p209, %s15, 1
          %s211 = smul.addr %s210, 2
          %s212 = smul.addr %s211, 8
          %s213 = scalar_lea.vmem %s0, %s212
        $region40: #{tpu_custom_call.1} parent=35 // pred_fallthru
          _
      $region36: #{tpu_custom_call.1} parent=5 // pred_fallthru
        _
      %p214 = scmp.le.s32.totalorder 1, %s15
      %p215 = scmp.lt.s32.totalorder %s15, 3
      %p216 = pnand %p214, %p215
      %p217 = pneg %p216
      // Predicated region
      $region41: #{tpu_custom_call.1} parent=5 // pred_check
        _
      $region42: #{tpu_custom_call.1} parent=5 // pred_check_branch
        %219 = sbr.rel (%p216) target = $region44
      $region43: #{tpu_custom_call.1} parent=5 // pred_region
        %s220 = ssub.s32 %s15, 1
        %p221 = scmp.lt.s32.totalorder %s20, 1
        %s222 = scalar_select %p221, %s20, 1
        %s223 = smul.addr %s222, 2
        %s224 = smul.addr %s223, 8
        %s225 = scalar_lea.vmem %s0, %s224
        %p226 = pneg %p41
        %p227 = pneg %p38
        %p228 = pneg %p62
        %p229 = pneg %p59
        %p230 = pneg %p83
        %p231 = pneg %p80
        %p232 = pneg %p104
        %p233 = pneg %p101
        %p234 = pneg %p125
        %p235 = pneg %p122
        %p236 = pneg %p146
        %p237 = pneg %p143
        %p238 = pneg %p172
        %p239 = pneg %p169
        %s240 = sand.u32 %s159, 1
        %s241 = scalar_lea.sflag [#allocation4], %s240
        %s242 = sand.u32 %s159, 1
        %s243 = smul.addr %s242, 8
        %s244 = scalar_lea.vmem [#allocation3], %s243
        %p245 = scmp.lt.s32.totalorder %s20, 1
        %s246 = scalar_select %p245, %s20, 1
        %s247 = smul.addr %s246, 2
        %s248 = smul.addr %s247, 8
        %s249 = scalar_lea.vmem %s0, %s248
        %v251 = vld [vmem:[%s249] sm:$0xff]
        %v252 = vld [vmem:[%s249 + $0x8] sm:$0xf]
        %v253 = vld [vmem:[%s1] sm:$0xf]
        %v254 = vpack.c.bf16 %v252, %v251
        %v255 = vld [vmem:[%s3] sm:$0xff]
        %257 = vset.pattern.permute.xlu0 0
        %258 = vperm.xlu0 %257, %v255
        %v259 = vpop.permute.xlu0 %258
        %vm261 = vcmask 97280
        %v263 = vsel %vm261, %v253, 0
        %vm265 = vcmask 1045504
        %v267 = vsel %vm265, %v254, 0
        %269 = vmatpush.bf16.msra.mxu0 0
        %270 = vmatpush.bf16.msra.mxu0 0
        %271 = vmatpush.bf16.msra.mxu0 0
        %272 = vmatpush.bf16.msra.mxu0 0
        %273 = vmatpush.bf16.msra.mxu0 0
        %274 = vmatpush.bf16.msra.mxu0 0
        %275 = vmatpush.bf16.msra.mxu0 0
        %276 = vmatpush.bf16.msra.mxu0 %v267
        %277 = vmatmul.bf16.gmra.mxu0 %v263
        %v278 = vpop.f32.mrf.mxu0
        %v279 = vadd.f32 %v259, %v278
        %v280 = vpop.f32.mrf.mxu0
        %281 = vdwg.mxu0
        %v282 = vxor.u32 %v279, 2147483648
        %v283 = vmul.f32 %v282, 1.442695
        %v284 = vpow.pop %v283
        %v285 = vadd.f32 %v284, 1.0
        %v286 = vrcp.pop %v285
        %v287 = vmul.f32 %v285, %v286
        %v288 = vsub.f32 1.0, %v287
        %v289 = vmul.f32 %v286, %v288
        %v290 = vadd.f32 %v286, %v289
        %vm291 = vweird.f32 %v285
        %vm292 = vweird.f32 %v286
        %vm293 = vmor %vm291, %vm292
        %v294 = vsel %vm293, %v286, %v290
        %v295 = vand.u32 2147483647, %v285
        %vm296 = vcmp.eq.f32.partialorder %v295, 8.507059e+37
        %v297 = vand.u32 %v285, 2147483648
        %v298 = vor.u32 1.1754944e-38, %v297
        %v299 = vsel %vm296, %v298, %v294
        %v300 = vmul.f32 1.0, %v299
        %v301 = vmul.f32 %v279, %v300
        %vm302 = vcmask 31744
        %303 = vst.msk [vmem:[#allocation2] sm:$0xff] %vm302, 0.0
        %305 = vrot.lane.b32.xlu0 %v301, 4
        %v306 = vpop.permute.xlu0 %305
        %vm308 = vcmask 1047584
        %309 = vst.msk [vmem:[#allocation2] sm:$0xff] %vm308, %v306
        %vm310 = vcmask 15360
        %311 = vst.msk [vmem:[#allocation2 + $0x8] sm:$0xff] %vm310, 0.0
        %312 = vrot.lane.b32.xlu0 %v301, 2
        %v313 = vpop.permute.xlu0 %312
        %vm315 = vcmask 1047568
        %316 = vst.msk [vmem:[#allocation2 + $0x8] sm:$0xff] %vm315, %v313
        %317 = vst [vmem:[#allocation2 + $0x10] sm:$0xff] %v301
        %v318 = vld [vmem:[%s2] sm:$0xf]
        %v319 = vld [vmem:[#allocation2] sm:$0xff]
        %v320 = vld [vmem:[#allocation2 + $0x8] sm:$0xff]
        %v321 = vld [vmem:[#allocation2 + $0x10] sm:$0xff]
        %v322 = vpack.c.bf16 %v320, %v319
        %v323 = vpack.c.bf16 %v321, %v321
        %v324 = vld [vmem:[%s4] sm:$0xff]
        %326 = vset.pattern.permute.xlu0 0
        %327 = vperm.xlu0 %326, %v324
        %v328 = vpop.permute.xlu0 %327
        %vm330 = vcmask 195584
        %v332 = vsel %vm330, %v318, 0
        %vm334 = vcmask 1043456
        %v336 = vsel %vm334, %v323, 0
        %338 = vmatpush.bf16.msra.mxu0 0
        %339 = vmatpush.bf16.msra.mxu0 0
        %340 = vmatpush.bf16.msra.mxu0 0
        %341 = vmatpush.bf16.msra.mxu0 0
        %342 = vmatpush.bf16.msra.mxu0 0
        %343 = vmatpush.bf16.msra.mxu0 0
        %344 = vmatpush.bf16.msra.mxu0 %v336
        %345 = vmatpush.bf16.msra.mxu0 %v322
        %346 = vmatmul.bf16.gmra.mxu0 %v332
        %v347 = vpop.f32.mrf.mxu0
        %v348 = vadd.f32 %v328, %v347
        %v349 = vpop.f32.mrf.mxu0
        %350 = vdwg.mxu0
        %v351 = vld [vmem:[%s5] sm:$0xf]
        %v352 = vpack.c.bf16 %v252, %v252
        %v354 = vsel %vm302, %v351, 0
        %vm356 = vcmask 1041408
        %v358 = vsel %vm356, %v352, 0
        %360 = vmatpush.bf16.msra.mxu0 0
        %361 = vmatpush.bf16.msra.mxu0 0
        %362 = vmatpush.bf16.msra.mxu0 0
        %363 = vmatpush.bf16.msra.mxu0 0
        %364 = vmatpush.bf16.msra.mxu0 0
        %365 = vmatpush.bf16.msra.mxu0 0
        %366 = vmatpush.bf16.msra.mxu0 0
        %367 = vmatpush.bf16.msra.mxu0 %v358
        %368 = vmatmul.bf16.gmra.mxu0 %v354
        %v369 = vpop.f32.mrf.mxu0
        %v370 = vadd.f32 0.0, %v369
        %v371 = vpop.f32.mrf.mxu0
        %372 = vdwg.mxu0
        %v373 = vadd.f32 %v348, %v370
        %v374 = vxor.u32 %v373, 2147483648
        %v375 = vmul.f32 %v374, 1.442695
        %v376 = vpow.pop %v375
        %v377 = vadd.f32 %v376, 1.0
        %v378 = vrcp.pop %v377
        %v379 = vmul.f32 %v377, %v378
        %v380 = vsub.f32 1.0, %v379
        %v381 = vmul.f32 %v378, %v380
        %v382 = vadd.f32 %v378, %v381
        %vm383 = vweird.f32 %v377
        %vm384 = vweird.f32 %v378
        %vm385 = vmor %vm383, %vm384
        %v386 = vsel %vm385, %v378, %v382
        %v387 = vand.u32 2147483647, %v377
        %vm388 = vcmp.eq.f32.partialorder %v387, 8.507059e+37
        %v389 = vand.u32 %v377, 2147483648
        %v390 = vor.u32 1.1754944e-38, %v389
        %v391 = vsel %vm388, %v390, %v386
        %v392 = vmul.f32 1.0, %v391
        %v393 = vmul.f32 %v373, %v392
        %394 = vst [vmem:[%s244] sm:$0xff] %v393
        %s395 = sand.u32 %s159, 1
        %s396 = scalar_lea.sflag [#allocation4], %s395
        %s397 = sand.u32 %s159, 1
        %s398 = smul.addr %s397, 8
        %s399 = scalar_lea.vmem [#allocation3], %s398
        // Predicated region
        $region45: #{tpu_custom_call.1} parent=43 // pred_check
          %p400 = pneg %p169
        $region46: #{tpu_custom_call.1} parent=43 // pred_check_branch
          %402 = sbr.rel (%p400) target = $region48
        $region47: #{tpu_custom_call.1} parent=43 // pred_region
          %404 = vsyncadd %s396, 0
          %s405 = smul.addr %s20, 8
          %s406 = scalar_lea.hbm %s6, %s405
          %s408 = sshll.u32 %s399, 4
          %s409 = int_to_ptr.vmem [resolvable:$true] %s408
          %s410 = sshll.u32 %s406, 4
          %s411 = int_to_ptr.hbm [resolvable:$true] %s410
          %413 = dma.vmem_to_hbm [thread:$0]  %s409, 128, %s411, %s396
        $region48: #{tpu_custom_call.1} parent=43 // pred_fallthru
          _
      $region44: #{tpu_custom_call.1} parent=5 // pred_fallthru
        _
      %p414 = scmp.le.s32.totalorder 2, %s15
      // Predicated region
      $region49: #{tpu_custom_call.1} parent=5 // pred_check
        %p415 = pneg %p414
      $region50: #{tpu_custom_call.1} parent=5 // pred_check_branch
        %417 = sbr.rel (%p415) target = $region52
      $region51: #{tpu_custom_call.1} parent=5 // pred_region
        %s418 = ssub.s32 %s15, 2
        // Predicated region
        $region53: #{tpu_custom_call.1} parent=51 // pred_check
          %p419 = pneg %p175
        $region54: #{tpu_custom_call.1} parent=51 // pred_check_branch
          %421 = sbr.rel (%p419) target = $region56
        $region55: #{tpu_custom_call.1} parent=51 // pred_region
          %s422 = sand.u32 %s160, 1
          %s423 = scalar_lea.sflag [#allocation4], %s422
          %s424 = sand.u32 %s160, 1
          %s425 = smul.addr %s424, 8
          %s426 = scalar_lea.vmem [#allocation3], %s425
          %428 = dma.done %s423, 128
        $region56: #{tpu_custom_call.1} parent=51 // pred_fallthru
          _
      $region52: #{tpu_custom_call.1} parent=5 // pred_fallthru
        _
    $region6: #{tpu_custom_call.1} parent=1 // loop_footer
      %s19 = sadd.s32 1, %s15
    $region7: #{tpu_custom_call.1} parent=1 // loop_footer_branch
      %14 = sbr.rel target = $region3
    $region8: #{tpu_custom_call.1} parent=1 // loop_exit
      _
    %429 = vsyncpa [#allocation4], 1
    %s430 = scalar_lea.sflag [#allocation4], 1
    %431 = vsyncpa %s430, 1

</llo_original>
